<compile_context>
chip_gen: v7x
topology: tpu7x:2x2x1
jax: 0.10.0
libtpu: 0.0.40
codegen_flags: <defaults>
</compile_context>

<pallas_src>
import functools

import jax
import jax.numpy as jnp
from jax import lax
from jax.experimental import pallas as pl
from jax.experimental.pallas import tpu as pltpu


def _round_up(a: int, b: int) -> int:
    return (a + b - 1) // b * b


def _vmem_capacity_bytes() -> int:
    try:
        return int(pltpu.get_tpu_info().vmem_capacity_bytes)
    except Exception:
        return 64 * 1024 * 1024  # conservative (v7x-sized) default


def _mxu_lane_multiple() -> int:
    try:
        kind = jax.devices()[0].device_kind.lower()
    except Exception:
        kind = ""
    # v6e / v7x have 256-wide MXUs; v5e (and older) are 128-wide.
    return 256 if ("v6" in kind or "v7" in kind) else 128


def _pad_dim(d: int, mxu_mult: int) -> int:
    # Lane-dense (>=128); on 256-wide-MXU chips round dims that span more than
    # one 128-lane tile up to 256 so MXU tiles are full.
    if mxu_mult > 128 and d > 128:
        return _round_up(d, mxu_mult)
    return _round_up(d, 128)


def _const_block_spec(shape):
    """Constant-index parameter block; single-buffered to save VMEM."""
    index_map = lambda i: (0,) * len(shape)
    try:
        return pl.BlockSpec(shape, index_map, pipeline_mode=pl.Buffered(1))
    except TypeError:  # pipeline_mode unsupported: fall back to default buffering
        return pl.BlockSpec(shape, index_map)


def _timesfm_mlp_kernel(
    x_ref,        # (TR, Hp)  input rows (residual source), f32
    pad_ref,      # (TR, 1)   paddings (0/1) per row, f32
    ln_w_ref,     # (1, Hp)   layer-norm gamma (zero in padded lanes)
    ln_b_ref,     # (1, Hp)   layer-norm beta  (zero in padded lanes)
    wg_ref,       # (Hp, Ip)  gate_proj weight, [in, out], compute dtype
    bg_ref,       # (1, Ip)   gate_proj bias, f32
    wd_ref,       # (Ip, Hp)  down_proj weight, [in, out], compute dtype
    bd_ref,       # (1, Hp)   down_proj bias, f32
    out_ref,      # (TR, Hp)  output rows
    *,
    h_real: int,              # true (unpadded) hidden size for LN statistics
    sub_rows: int,            # rows per in-kernel sub-block
    n_sub: int,               # number of sub-blocks per grid step
    apply_padding_mask: bool,
):
    # Small params hoisted out of the sub-block loop.
    ln_w = ln_w_ref[...]
    ln_b = ln_b_ref[...]
    bg = bg_ref[...]
    bd = bd_ref[...]
    inv_h = jnp.float32(1.0 / h_real)

    # Static unroll over independent row sub-blocks: lets the scheduler overlap
    # sub-block j+1's VPU (LayerNorm / ReLU / epilogue) work with sub-block j's
    # MXU matmuls.
    for j in range(n_sub):
        r0 = j * sub_rows
        x = x_ref[pl.ds(r0, sub_rows), :].astype(jnp.float32)

        # LayerNorm (eps=1e-6, biased variance) over the real hidden dim.
        # Padded lanes of x are zero, so E[x] and E[x^2] over Hp lanes equal the
        # sums over the real h_real lanes -- no lane mask needed.
        mean = jnp.sum(x, axis=-1, keepdims=True) * inv_h
        ex2 = jnp.sum(x * x, axis=-1, keepdims=True) * inv_h
        var = jnp.maximum(ex2 - mean * mean, 0.0)
        inv_std = lax.rsqrt(var + 1e-6)
        # gamma/beta are zero in padded lanes -> gate_inp is zero there.
        gate_inp = (x - mean) * (inv_std * ln_w) + ln_b

        # gate_proj + ReLU (MXU, f32 accumulation).
        gate = jnp.dot(gate_inp.astype(wg_ref.dtype), wg_ref[...],
                       preferred_element_type=jnp.float32)
        gate = jnp.maximum(gate + bg, 0.0)

        # down_proj (MXU).
        out = jnp.dot(gate.astype(wd_ref.dtype), wd_ref[...],
                      preferred_element_type=jnp.float32)

        # Fused bias + padding mask + residual epilogue.
        if apply_padding_mask:
            mask = 1.0 - pad_ref[pl.ds(r0, sub_rows), :]
            res = (out + bd) * mask + x
        else:
            res = out + bd + x
        out_ref[pl.ds(r0, sub_rows), :] = res.astype(out_ref.dtype)


@functools.partial(jax.jit, static_argnames=("row_tile", "compute_dtype"))
def timesfm_mlp(x, paddings, params, *, row_tile=None,
                compute_dtype=jnp.bfloat16):
    """x: [B, S, H] float32; paddings: [B, S] float32 (0/1) or None."""
    B, S, H = x.shape
    rows = B * S
    I = params["w_gate"].shape[1]

    mxu_mult = _mxu_lane_multiple()
    Hp = _pad_dim(H, mxu_mult)
    Ip = _pad_dim(I, mxu_mult)

    vmem_cap = _vmem_capacity_bytes()

    # ---- row tiling (VMEM-aware default; prefer exact divisors of rows so the
    #      wrapper-side pad + slice HBM passes are skipped) ----
    if row_tile is None:
        target = 1024 if vmem_cap >= 100 * 1024 * 1024 else 512
        if rows <= target:
            row_tile = max(_round_up(rows, 8), 8)
        elif rows % target == 0:
            row_tile = target
        elif rows % (target // 2) == 0:
            row_tile = target // 2
        else:
            row_tile = target
    rows_p = _round_up(rows, row_tile)
    grid = (rows_p // row_tile,)

    # In-kernel sub-blocking: 2-4 sub-blocks of 128-256 rows.
    sub_rows = row_tile
    for cand in (256, 128):
        if row_tile > cand and row_tile % cand == 0:
            sub_rows = cand
            break
    n_sub = row_tile // sub_rows

    f32b = 4
    w_bytes = jnp.dtype(compute_dtype).itemsize
    apply_padding_mask = paddings is not None

    # ---- operands (pad only when actually needed) ----
    x2d = x.reshape(rows, H)
    if rows_p != rows or Hp != H:
        x2d = jnp.pad(x2d, ((0, rows_p - rows), (0, Hp - H)))

    if paddings is None:
        pad2d = jnp.zeros((rows_p, 1), jnp.float32)
    else:
        pad2d = paddings.reshape(rows, 1).astype(jnp.float32)
        if rows_p != rows:
            pad2d = jnp.pad(pad2d, ((0, rows_p - rows), (0, 0)))

    ln_w = jnp.pad(params["ln_w"].astype(jnp.float32), (0, Hp - H)).reshape(1, Hp)
    ln_b = jnp.pad(params["ln_b"].astype(jnp.float32), (0, Hp - H)).reshape(1, Hp)
    w_gate = jnp.pad(params["w_gate"], ((0, Hp - H), (0, Ip - I))).astype(compute_dtype)
    b_gate = jnp.pad(params["b_gate"].astype(jnp.float32), (0, Ip - I)).reshape(1, Ip)
    w_down = jnp.pad(params["w_down"], ((0, Ip - I), (0, Hp - H))).astype(compute_dtype)
    b_down = jnp.pad(params["b_down"].astype(jnp.float32), (0, Hp - H)).reshape(1, Hp)

    # ---- VMEM budget: double-buffered activation tiles + single-buffered
    #      params + sub-block temporaries, capped to physical VMEM. ----
    vmem_est = (
        2 * (row_tile * Hp * f32b       # x tiles (double-buffered)
             + row_tile * Hp * f32b     # out tiles
             + row_tile * f32b)         # padding tiles
        + 2 * Hp * Ip * w_bytes         # gate + down weights (single-buffered)
        + (3 * Hp + Ip) * f32b          # ln gamma/beta + biases
        + 2 * sub_rows * Ip * f32b      # gate_inp / gate temporaries
        + 2 * sub_rows * Hp * f32b      # LN / epilogue temporaries
    )
    vmem_limit = int(min(max(int(vmem_est * 1.25), 32 * 1024 * 1024),
                         int(0.85 * vmem_cap)))

    cost = pl.CostEstimate(
        flops=4 * rows_p * Hp * Ip + 10 * rows_p * Hp,
        transcendentals=rows_p,
        bytes_accessed=(
            2 * rows_p * Hp * f32b          # x in, out out
            + rows_p * f32b                 # paddings
            + 2 * Hp * Ip * w_bytes         # weights
            + (3 * Hp + Ip) * f32b          # ln params + biases
        ),
    )

    # TODO(synk): for TimesFM variants whose weights (2*Hp*Ip*w_bytes) no longer
    # fit comfortably in v7x's 64 MiB VMEM, add a second "arbitrary" grid axis
    # that streams w_gate column-blocks / w_down row-blocks with an f32
    # accumulator instead of keeping both weights fully resident.

    out2d = pl.pallas_call(
        functools.partial(_timesfm_mlp_kernel, h_real=H, sub_rows=sub_rows,
                          n_sub=n_sub, apply_padding_mask=apply_padding_mask),
        out_shape=jax.ShapeDtypeStruct((rows_p, Hp), x.dtype),
        grid_spec=pltpu.PrefetchScalarGridSpec(
            num_scalar_prefetch=0,
            grid=grid,
            in_specs=[
                pl.BlockSpec((row_tile, Hp), lambda i: (i, 0)),   # x rows
                pl.BlockSpec((row_tile, 1), lambda i: (i, 0)),    # paddings
                _const_block_spec((1, Hp)),    # ln gamma
                _const_block_spec((1, Hp)),    # ln beta
                _const_block_spec((Hp, Ip)),   # w_gate
                _const_block_spec((1, Ip)),    # b_gate
                _const_block_spec((Ip, Hp)),   # w_down
                _const_block_spec((1, Hp)),    # b_down
            ],
            out_specs=pl.BlockSpec((row_tile, Hp), lambda i: (i, 0)),
        ),
        compiler_params=pltpu.CompilerParams(
            dimension_semantics=("parallel",),
            vmem_limit_bytes=vmem_limit,
        ),
        cost_estimate=cost,
    )(x2d, pad2d, ln_w, ln_b, w_gate, b_gate, w_down, b_down)

    if rows_p != rows or Hp != H:
        out2d = out2d[:rows, :H]
    return out2d.reshape(B, S, H)


def _reference(x, paddings, params):
    """Pure-JAX f32 reference mirroring the PyTorch forward."""
    mean = jnp.mean(x, axis=-1, keepdims=True)
    var = jnp.mean((x - mean) ** 2, axis=-1, keepdims=True)
    xn = (x - mean) / jnp.sqrt(var + 1e-6)
    gate_inp = xn * params["ln_w"] + params["ln_b"]
    gate = jnp.maximum(gate_inp @ params["w_gate"] + params["b_gate"], 0.0)
    out = gate @ params["w_down"] + params["b_down"]
    if paddings is not None:
        out = out * (1.0 - paddings[:, :, None])
    return out + x


def _make_params(key, H, I, scale=0.05):
    kw, kbg, kwd, kbd, klw, klb = jax.random.split(key, 6)
    return {
        # nn.Linear(H, I).weight is [I, H]; stored transposed as [H, I].
        "w_gate": jax.random.normal(kw, (H, I), dtype=jnp.float32) * scale,
        "b_gate": jax.random.normal(kbg, (I,), dtype=jnp.float32) * scale,
        # nn.Linear(I, H).weight is [H, I]; stored transposed as [I, H].
        "w_down": jax.random.normal(kwd, (I, H), dtype=jnp.float32) * scale,
        "b_down": jax.random.normal(kbd, (H,), dtype=jnp.float32) * scale,
        "ln_w": 1.0 + 0.1 * jax.random.normal(klw, (H,), dtype=jnp.float32),
        "ln_b": 0.1 * jax.random.normal(klb, (H,), dtype=jnp.float32),
    }


if __name__ == "__main__":
    # ---- small config: hidden_size=32, intermediate_size=64, batch=2, seq=8 ----
    B, S, H, I = 2, 8, 32, 64
    key = jax.random.PRNGKey(0)
    k_x, k_p, k_params = jax.random.split(key, 3)

    x = jax.random.normal(k_x, (B, S, H), dtype=jnp.float32)
    paddings = (jax.random.uniform(k_p, (B, S)) > 0.7).astype(jnp.float32)
    params = _make_params(k_params, H, I)

    ref = _reference(x, paddings, params)

    # f32 escape-hatch path (row_tile=8 -> 2-step pipelined grid on this shape).
    out_f32 = jax.block_until_ready(
        timesfm_mlp(x, paddings, params, row_tile=8, compute_dtype=jnp.float32))
    assert out_f32.shape == (B, S, H)
    assert jnp.allclose(out_f32, ref, atol=5e-3, rtol=5e-3), "f32 mismatch vs reference"

    # Production bf16 MXU path (f32 accumulation), looser tolerance.
    out_bf16 = jax.block_until_ready(
        timesfm_mlp(x, paddings, params, row_tile=8))
    assert jnp.allclose(out_bf16, ref, atol=2e-2, rtol=2e-2), "bf16 mismatch vs reference"

    # paddings=None path (module allows it).
    ref_none = _reference(x, None, params)
    out_none = jax.block_until_ready(
        timesfm_mlp(x, None, params, row_tile=8, compute_dtype=jnp.float32))
    assert jnp.allclose(out_none, ref_none, atol=5e-3, rtol=5e-3), "paddings=None mismatch"

    # ---- medium config: exercises default (VMEM-aware) tiling + in-kernel
    #      sub-block interleave (512 rows -> 2 x 256-row sub-blocks). ----
    B2, S2, H2, I2 = 2, 256, 128, 256
    key2 = jax.random.PRNGKey(1)
    k2x, k2p, k2params = jax.random.split(key2, 3)
    x2 = jax.random.normal(k2x, (B2, S2, H2), dtype=jnp.float32)
    pad2 = (jax.random.uniform(k2p, (B2, S2)) > 0.8).astype(jnp.float32)
    params2 = _make_params(k2params, H2, I2, scale=0.03)

    ref2 = _reference(x2, pad2, params2)
    out2 = jax.block_until_ready(
        timesfm_mlp(x2, pad2, params2, compute_dtype=jnp.float32))
    assert out2.shape == (B2, S2, H2)
    assert jnp.allclose(out2, ref2, atol=5e-3, rtol=5e-3), "medium-shape mismatch"

    print("KERNEL_OK")
</pallas_src>

<mosaic_0001>
module attributes {stable_mosaic.version = 11 : i64} {
  func.func @_timesfm_mlp_kernel(%arg0: i32, %arg1: memref<8x128xf32, #tpu.memory_space<vmem>>, %arg2: memref<8x1xf32, #tpu.memory_space<vmem>>, %arg3: memref<1x128xf32, #tpu.memory_space<vmem>>, %arg4: memref<1x128xf32, #tpu.memory_space<vmem>>, %arg5: memref<128x128xf32, #tpu.memory_space<vmem>>, %arg6: memref<1x128xf32, #tpu.memory_space<vmem>>, %arg7: memref<128x128xf32, #tpu.memory_space<vmem>>, %arg8: memref<1x128xf32, #tpu.memory_space<vmem>>, %arg9: memref<8x128xf32, #tpu.memory_space<vmem>>) attributes {dimension_semantics = [#tpu.dimension_semantics<parallel>], iteration_bounds = array<i64: 2>, scalar_prefetch = 0 : i64, scratch_operands = 0 : i64, tpu.core_type = #tpu.core_type<tc>, window_params = [{transform_indices = @transform_0, window_bounds = array<i64: 8, 128>}, {transform_indices = @transform_1, window_bounds = array<i64: 8, 1>}, {pipeline_mode = #tpu.pipeline_mode<synchronous>, transform_indices = @transform_2, window_bounds = array<i64: 1, 128>}, {pipeline_mode = #tpu.pipeline_mode<synchronous>, transform_indices = @transform_3, window_bounds = array<i64: 1, 128>}, {pipeline_mode = #tpu.pipeline_mode<synchronous>, transform_indices = @transform_4, window_bounds = array<i64: 128, 128>}, {pipeline_mode = #tpu.pipeline_mode<synchronous>, transform_indices = @transform_5, window_bounds = array<i64: 1, 128>}, {pipeline_mode = #tpu.pipeline_mode<synchronous>, transform_indices = @transform_6, window_bounds = array<i64: 128, 128>}, {pipeline_mode = #tpu.pipeline_mode<synchronous>, transform_indices = @transform_7, window_bounds = array<i64: 1, 128>}, {transform_indices = @transform_8, window_bounds = array<i64: 8, 128>}]} {
    %c0 = arith.constant 0 : index
    %c0_0 = arith.constant 0 : index
    %0 = vector.load %arg3[%c0, %c0_0] : memref<1x128xf32, #tpu.memory_space<vmem>>, vector<1x128xf32>
    %c0_1 = arith.constant 0 : index
    %c0_2 = arith.constant 0 : index
    %1 = vector.load %arg4[%c0_1, %c0_2] : memref<1x128xf32, #tpu.memory_space<vmem>>, vector<1x128xf32>
    %c0_3 = arith.constant 0 : index
    %c0_4 = arith.constant 0 : index
    %2 = vector.load %arg6[%c0_3, %c0_4] : memref<1x128xf32, #tpu.memory_space<vmem>>, vector<1x128xf32>
    %c0_5 = arith.constant 0 : index
    %c0_6 = arith.constant 0 : index
    %3 = vector.load %arg8[%c0_5, %c0_6] : memref<1x128xf32, #tpu.memory_space<vmem>>, vector<1x128xf32>
    %c0_7 = arith.constant 0 : index
    %c0_8 = arith.constant 0 : index
    %4 = vector.load %arg1[%c0_7, %c0_8] : memref<8x128xf32, #tpu.memory_space<vmem>>, vector<8x128xf32>
    %cst = arith.constant dense<0.000000e+00> : vector<8xf32>
    %5 = vector.multi_reduction <add>, %4, %cst [1] : vector<8x128xf32> to vector<8xf32>
    %6 = vector.shape_cast %5 : vector<8xf32> to vector<8x1xf32>
    %cst_9 = arith.constant 3.125000e-02 : f32
    %7 = vector.broadcast %cst_9 : f32 to vector<8x1xf32>
    %8 = arith.mulf %6, %7 : vector<8x1xf32>
    %9 = arith.mulf %4, %4 : vector<8x128xf32>
    %cst_10 = arith.constant dense<0.000000e+00> : vector<8xf32>
    %10 = vector.multi_reduction <add>, %9, %cst_10 [1] : vector<8x128xf32> to vector<8xf32>
    %11 = vector.shape_cast %10 : vector<8xf32> to vector<8x1xf32>
    %cst_11 = arith.constant 3.125000e-02 : f32
    %12 = vector.broadcast %cst_11 : f32 to vector<8x1xf32>
    %13 = arith.mulf %11, %12 : vector<8x1xf32>
    %14 = arith.mulf %8, %8 : vector<8x1xf32>
    %15 = arith.subf %13, %14 : vector<8x1xf32>
    %cst_12 = arith.constant 0.000000e+00 : f32
    %16 = vector.broadcast %cst_12 : f32 to vector<8x1xf32>
    %17 = arith.maximumf %15, %16 : vector<8x1xf32>
    %cst_13 = arith.constant 9.99999997E-7 : f32
    %18 = vector.broadcast %cst_13 : f32 to vector<8x1xf32>
    %19 = arith.addf %17, %18 : vector<8x1xf32>
    %20 = math.rsqrt %19 : vector<8x1xf32>
    %21 = vector.broadcast %8 : vector<8x1xf32> to vector<8x128xf32>
    %22 = arith.subf %4, %21 : vector<8x128xf32>
    %23 = vector.broadcast %20 : vector<8x1xf32> to vector<8x128xf32>
    %24 = vector.broadcast %0 : vector<1x128xf32> to vector<8x128xf32>
    %25 = arith.mulf %23, %24 : vector<8x128xf32>
    %26 = arith.mulf %22, %25 : vector<8x128xf32>
    %27 = vector.broadcast %1 : vector<1x128xf32> to vector<8x128xf32>
    %28 = arith.addf %26, %27 : vector<8x128xf32>
    %c0_14 = arith.constant 0 : index
    %c0_15 = arith.constant 0 : index
    %29 = vector.load %arg5[%c0_14, %c0_15] : memref<128x128xf32, #tpu.memory_space<vmem>>, vector<128x128xf32>
    %cst_16 = arith.constant dense<0.000000e+00> : vector<8x128xf32>
    %30 = tpu.matmul %28, %29, %cst_16 {dimension_numbers = #tpu.dot_dimension_numbers<[1], [0], [0], [1], [0, 0, 1, 1], [], []>} : vector<8x128xf32>, vector<128x128xf32>, vector<8x128xf32> -> vector<8x128xf32>
    %31 = vector.broadcast %2 : vector<1x128xf32> to vector<8x128xf32>
    %32 = arith.addf %30, %31 : vector<8x128xf32>
    %cst_17 = arith.constant 0.000000e+00 : f32
    %33 = vector.broadcast %cst_17 : f32 to vector<8x128xf32>
    %34 = arith.maximumf %32, %33 : vector<8x128xf32>
    %c0_18 = arith.constant 0 : index
    %c0_19 = arith.constant 0 : index
    %35 = vector.load %arg7[%c0_18, %c0_19] : memref<128x128xf32, #tpu.memory_space<vmem>>, vector<128x128xf32>
    %cst_20 = arith.constant dense<0.000000e+00> : vector<8x128xf32>
    %36 = tpu.matmul %34, %35, %cst_20 {dimension_numbers = #tpu.dot_dimension_numbers<[1], [0], [0], [1], [0, 0, 1, 1], [], []>} : vector<8x128xf32>, vector<128x128xf32>, vector<8x128xf32> -> vector<8x128xf32>
    %c0_21 = arith.constant 0 : index
    %c0_22 = arith.constant 0 : index
    %37 = vector.load %arg2[%c0_21, %c0_22] : memref<8x1xf32, #tpu.memory_space<vmem>>, vector<8x1xf32>
    %cst_23 = arith.constant 1.000000e+00 : f32
    %38 = vector.broadcast %cst_23 : f32 to vector<8x1xf32>
    %39 = arith.subf %38, %37 : vector<8x1xf32>
    %40 = vector.broadcast %3 : vector<1x128xf32> to vector<8x128xf32>
    %41 = arith.addf %36, %40 : vector<8x128xf32>
    %42 = vector.broadcast %39 : vector<8x1xf32> to vector<8x128xf32>
    %43 = arith.mulf %41, %42 : vector<8x128xf32>
    %44 = arith.addf %43, %4 : vector<8x128xf32>
    %c0_24 = arith.constant 0 : index
    %c0_25 = arith.constant 0 : index
    %45 = vector.load %arg9[%c0_24, %c0_25] : memref<8x128xf32, #tpu.memory_space<vmem>>, vector<8x128xf32>
    tpu.vector_store %arg9[%c0_24, %c0_25], %44 {strides = array<i32>} : memref<8x128xf32, #tpu.memory_space<vmem>>, vector<8x128xf32>,
    return
  }
  func.func @transform_0(%arg0: i32) -> (i32, i32) {
    %c0_i32 = arith.constant 0 : i32
    %c0_i32_0 = arith.constant 0 : i32
    return %arg0, %c0_i32 : i32, i32
  }
  func.func @transform_1(%arg0: i32) -> (i32, i32) {
    %c0_i32 = arith.constant 0 : i32
    %c0_i32_0 = arith.constant 0 : i32
    return %arg0, %c0_i32 : i32, i32
  }
  func.func @transform_2(%arg0: i32) -> (i32, i32) {
    %c0_i32 = arith.constant 0 : i32
    %c0_i32_0 = arith.constant 0 : i32
    %c0_i32_1 = arith.constant 0 : i32
    return %c0_i32, %c0_i32_0 : i32, i32
  }
  func.func @transform_3(%arg0: i32) -> (i32, i32) {
    %c0_i32 = arith.constant 0 : i32
    %c0_i32_0 = arith.constant 0 : i32
    %c0_i32_1 = arith.constant 0 : i32
    return %c0_i32, %c0_i32_0 : i32, i32
  }
  func.func @transform_4(%arg0: i32) -> (i32, i32) {
    %c0_i32 = arith.constant 0 : i32
    %c0_i32_0 = arith.constant 0 : i32
    %c0_i32_1 = arith.constant 0 : i32
    return %c0_i32, %c0_i32_0 : i32, i32
  }
  func.func @transform_5(%arg0: i32) -> (i32, i32) {
    %c0_i32 = arith.constant 0 : i32
    %c0_i32_0 = arith.constant 0 : i32
    %c0_i32_1 = arith.constant 0 : i32
    return %c0_i32, %c0_i32_0 : i32, i32
  }
  func.func @transform_6(%arg0: i32) -> (i32, i32) {
    %c0_i32 = arith.constant 0 : i32
    %c0_i32_0 = arith.constant 0 : i32
    %c0_i32_1 = arith.constant 0 : i32
    return %c0_i32, %c0_i32_0 : i32, i32
  }
  func.func @transform_7(%arg0: i32) -> (i32, i32) {
    %c0_i32 = arith.constant 0 : i32
    %c0_i32_0 = arith.constant 0 : i32
    %c0_i32_1 = arith.constant 0 : i32
    return %c0_i32, %c0_i32_0 : i32, i32
  }
  func.func @transform_8(%arg0: i32) -> (i32, i32) {
    %c0_i32 = arith.constant 0 : i32
    %c0_i32_0 = arith.constant 0 : i32
    return %arg0, %c0_i32 : i32, i32
  }
}

</mosaic_0001>

<llo_original>
// kernel: timesfm_mlp.1
$region0: #{timesfm_mlp.1}
  #allocation0 [shape = 'u32[]', space=smem, size = 0x4, offset = 0x4, fixed_abs, tag = 'smem constant byte address 0x4 - core index']
  #allocation1 [shape = 'u32[144,128]{1,0:T(1,128)}', space=vmem, size = 0x12000, scoped, tag = 'internal scratch']
  %s0 = inlined_call_operand.vmem [shape: f32[16,128], index: 0, kind: input, shape index: {}]
  %s1 = inlined_call_operand.vmem [shape: f32[16,1], index: 1, kind: input, shape index: {}]
  %s2 = inlined_call_operand.vmem [shape: f32[1,128], index: 2, kind: input, shape index: {}]
  %s3 = inlined_call_operand.vmem [shape: f32[1,128], index: 3, kind: input, shape index: {}]
  %s4 = inlined_call_operand.vmem [shape: f32[128,128], index: 4, kind: input, shape index: {}]
  %s5 = inlined_call_operand.vmem [shape: f32[1,128], index: 5, kind: input, shape index: {}]
  %s6 = inlined_call_operand.vmem [shape: f32[128,128], index: 6, kind: input, shape index: {}]
  %s7 = inlined_call_operand.vmem [shape: f32[1,128], index: 7, kind: input, shape index: {}]
  %s8 = inlined_call_operand.vmem [shape: f32[16,128], index: 8, kind: output, shape index: {}]
  %s9 = sld [smem:[#allocation0]]
  $region65: #{timesfm_mlp.1} parent=0
    _
  %s11 = ssub.s32 1, %s9
  %s12 = scalar_select 0, %s11, %s9
  loop: start=0, step=1, limit=4
  $region2: #{timesfm_mlp.1} parent=0 // loop_pre_header
    _
  $region3: #{timesfm_mlp.1} parent=0 // loop_header
    %s14 = sphi 0, %s18
    %p15 = scmp.ge.s32.totalorder %s14, 4
    %s24 = sphi 0, %s26
    %s27 = sphi 0, %s24
    %s28 = sphi 0, %s27
    %s44 = sphi 0, %s28
    %s50 = sphi 0, %s52
    %s53 = sphi 0, %s50
    %s54 = sphi 0, %s53
    %s70 = sphi 0, %s54
    %s74 = sphi 0, %s74
    %s76 = sphi 0, %s74
    %s77 = sphi 0, %s76
    %s91 = sphi 0, %s77
    %s95 = sphi 0, %s95
    %s97 = sphi 0, %s95
    %s98 = sphi 0, %s97
    %s112 = sphi 0, %s98
    %s116 = sphi 0, %s116
    %s118 = sphi 0, %s116
    %s119 = sphi 0, %s118
    %s133 = sphi 0, %s119
    %s137 = sphi 0, %s137
    %s139 = sphi 0, %s137
    %s140 = sphi 0, %s139
    %s154 = sphi 0, %s140
    %s158 = sphi 0, %s158
    %s160 = sphi 0, %s158
    %s161 = sphi 0, %s160
    %s175 = sphi 0, %s161
    %s179 = sphi 0, %s179
    %s181 = sphi 0, %s179
    %s182 = sphi 0, %s181
    %s196 = sphi 0, %s182
    %s202 = sphi 0, %s204
    %s205 = sphi 0, %s202
    %s206 = sphi 0, %s205
    %s222 = sphi 0, %s206
  $region4: #{timesfm_mlp.1} parent=0 // loop_header_branch
    %17 = sbr.rel (%p15) target = $region8
  $region5: #{timesfm_mlp.1} parent=0 // loop_body
    %s19 = ssub.s32 %s14, 1
    %s20 = ssub.s32 %s14, 2
    %s21 = sadd.s32 %s14, 1
    %s22 = ssub.s32 %s14, %s21
    %p23 = scmp.eq.s32.totalorder %s22, 0
    %s25 = sadd.s32 %s24, 1
    %s26 = scalar_select %p23, %s24, %s25
    %p29 = pneg %p23
    %p30 = scmp.eq.s32.totalorder %s14, 1
    %p31 = por %p29, %p30
    %p32 = scmp.ne.s32.totalorder %s24, %s27
    %p33 = scmp.eq.s32.totalorder %s14, 0
    %p34 = por %p32, %p33
    %p35 = scmp.ne.s32.totalorder %s24, %s27
    %p36 = scmp.eq.s32.totalorder %s19, 1
    %p37 = por %p35, %p36
    %p38 = scmp.ne.s32.totalorder %s27, %s28
    %p39 = scmp.eq.s32.totalorder %s19, 0
    %p40 = por %p38, %p39
    %p41 = scmp.ne.s32.totalorder %s27, %s28
    %p42 = scmp.eq.s32.totalorder %s20, 1
    %p43 = por %p41, %p42
    %p45 = scmp.ne.s32.totalorder %s28, %s44
    %p46 = scmp.eq.s32.totalorder %s20, 0
    %p47 = por %p45, %p46
    %s48 = ssub.s32 %s14, %s21
    %p49 = scmp.eq.s32.totalorder %s48, 0
    %s51 = sadd.s32 %s50, 1
    %s52 = scalar_select %p49, %s50, %s51
    %p55 = pneg %p49
    %p56 = scmp.eq.s32.totalorder %s14, 1
    %p57 = por %p55, %p56
    %p58 = scmp.ne.s32.totalorder %s50, %s53
    %p59 = scmp.eq.s32.totalorder %s14, 0
    %p60 = por %p58, %p59
    %p61 = scmp.ne.s32.totalorder %s50, %s53
    %p62 = scmp.eq.s32.totalorder %s19, 1
    %p63 = por %p61, %p62
    %p64 = scmp.ne.s32.totalorder %s53, %s54
    %p65 = scmp.eq.s32.totalorder %s19, 0
    %p66 = por %p64, %p65
    %p67 = scmp.ne.s32.totalorder %s53, %s54
    %p68 = scmp.eq.s32.totalorder %s20, 1
    %p69 = por %p67, %p68
    %p71 = scmp.ne.s32.totalorder %s54, %s70
    %p72 = scmp.eq.s32.totalorder %s20, 0
    %p73 = por %p71, %p72
    %s75 = sadd.s32 %s74, 1
    %p78 = scmp.eq.s32.totalorder %s14, 1
    %p79 = scmp.ne.s32.totalorder %s74, %s76
    %p80 = scmp.eq.s32.totalorder %s14, 0
    %p81 = por %p79, %p80
    %p82 = scmp.ne.s32.totalorder %s74, %s76
    %p83 = scmp.eq.s32.totalorder %s19, 1
    %p84 = por %p82, %p83
    %p85 = scmp.ne.s32.totalorder %s76, %s77
    %p86 = scmp.eq.s32.totalorder %s19, 0
    %p87 = por %p85, %p86
    %p88 = scmp.ne.s32.totalorder %s76, %s77
    %p89 = scmp.eq.s32.totalorder %s20, 1
    %p90 = por %p88, %p89
    %p92 = scmp.ne.s32.totalorder %s77, %s91
    %p93 = scmp.eq.s32.totalorder %s20, 0
    %p94 = por %p92, %p93
    %s96 = sadd.s32 %s95, 1
    %p99 = scmp.eq.s32.totalorder %s14, 1
    %p100 = scmp.ne.s32.totalorder %s95, %s97
    %p101 = scmp.eq.s32.totalorder %s14, 0
    %p102 = por %p100, %p101
    %p103 = scmp.ne.s32.totalorder %s95, %s97
    %p104 = scmp.eq.s32.totalorder %s19, 1
    %p105 = por %p103, %p104
    %p106 = scmp.ne.s32.totalorder %s97, %s98
    %p107 = scmp.eq.s32.totalorder %s19, 0
    %p108 = por %p106, %p107
    %p109 = scmp.ne.s32.totalorder %s97, %s98
    %p110 = scmp.eq.s32.totalorder %s20, 1
    %p111 = por %p109, %p110
    %p113 = scmp.ne.s32.totalorder %s98, %s112
    %p114 = scmp.eq.s32.totalorder %s20, 0
    %p115 = por %p113, %p114
    %s117 = sadd.s32 %s116, 1
    %p120 = scmp.eq.s32.totalorder %s14, 1
    %p121 = scmp.ne.s32.totalorder %s116, %s118
    %p122 = scmp.eq.s32.totalorder %s14, 0
    %p123 = por %p121, %p122
    %p124 = scmp.ne.s32.totalorder %s116, %s118
    %p125 = scmp.eq.s32.totalorder %s19, 1
    %p126 = por %p124, %p125
    %p127 = scmp.ne.s32.totalorder %s118, %s119
    %p128 = scmp.eq.s32.totalorder %s19, 0
    %p129 = por %p127, %p128
    %p130 = scmp.ne.s32.totalorder %s118, %s119
    %p131 = scmp.eq.s32.totalorder %s20, 1
    %p132 = por %p130, %p131
    %p134 = scmp.ne.s32.totalorder %s119, %s133
    %p135 = scmp.eq.s32.totalorder %s20, 0
    %p136 = por %p134, %p135
    %s138 = sadd.s32 %s137, 1
    %p141 = scmp.eq.s32.totalorder %s14, 1
    %p142 = scmp.ne.s32.totalorder %s137, %s139
    %p143 = scmp.eq.s32.totalorder %s14, 0
    %p144 = por %p142, %p143
    %p145 = scmp.ne.s32.totalorder %s137, %s139
    %p146 = scmp.eq.s32.totalorder %s19, 1
    %p147 = por %p145, %p146
    %p148 = scmp.ne.s32.totalorder %s139, %s140
    %p149 = scmp.eq.s32.totalorder %s19, 0
    %p150 = por %p148, %p149
    %p151 = scmp.ne.s32.totalorder %s139, %s140
    %p152 = scmp.eq.s32.totalorder %s20, 1
    %p153 = por %p151, %p152
    %p155 = scmp.ne.s32.totalorder %s140, %s154
    %p156 = scmp.eq.s32.totalorder %s20, 0
    %p157 = por %p155, %p156
    %s159 = sadd.s32 %s158, 1
    %p162 = scmp.eq.s32.totalorder %s14, 1
    %p163 = scmp.ne.s32.totalorder %s158, %s160
    %p164 = scmp.eq.s32.totalorder %s14, 0
    %p165 = por %p163, %p164
    %p166 = scmp.ne.s32.totalorder %s158, %s160
    %p167 = scmp.eq.s32.totalorder %s19, 1
    %p168 = por %p166, %p167
    %p169 = scmp.ne.s32.totalorder %s160, %s161
    %p170 = scmp.eq.s32.totalorder %s19, 0
    %p171 = por %p169, %p170
    %p172 = scmp.ne.s32.totalorder %s160, %s161
    %p173 = scmp.eq.s32.totalorder %s20, 1
    %p174 = por %p172, %p173
    %p176 = scmp.ne.s32.totalorder %s161, %s175
    %p177 = scmp.eq.s32.totalorder %s20, 0
    %p178 = por %p176, %p177
    %s180 = sadd.s32 %s179, 1
    %p183 = scmp.eq.s32.totalorder %s14, 1
    %p184 = scmp.ne.s32.totalorder %s179, %s181
    %p185 = scmp.eq.s32.totalorder %s14, 0
    %p186 = por %p184, %p185
    %p187 = scmp.ne.s32.totalorder %s179, %s181
    %p188 = scmp.eq.s32.totalorder %s19, 1
    %p189 = por %p187, %p188
    %p190 = scmp.ne.s32.totalorder %s181, %s182
    %p191 = scmp.eq.s32.totalorder %s19, 0
    %p192 = por %p190, %p191
    %p193 = scmp.ne.s32.totalorder %s181, %s182
    %p194 = scmp.eq.s32.totalorder %s20, 1
    %p195 = por %p193, %p194
    %p197 = scmp.ne.s32.totalorder %s182, %s196
    %p198 = scmp.eq.s32.totalorder %s20, 0
    %p199 = por %p197, %p198
    %s200 = ssub.s32 %s14, %s21
    %p201 = scmp.eq.s32.totalorder %s200, 0
    %s203 = sadd.s32 %s202, 1
    %s204 = scalar_select %p201, %s202, %s203
    %p207 = pneg %p201
    %p208 = scmp.eq.s32.totalorder %s14, 1
    %p209 = por %p207, %p208
    %p210 = scmp.ne.s32.totalorder %s202, %s205
    %p211 = scmp.eq.s32.totalorder %s14, 0
    %p212 = por %p210, %p211
    %p213 = scmp.ne.s32.totalorder %s202, %s205
    %p214 = scmp.eq.s32.totalorder %s19, 1
    %p215 = por %p213, %p214
    %p216 = scmp.ne.s32.totalorder %s205, %s206
    %p217 = scmp.eq.s32.totalorder %s19, 0
    %p218 = por %p216, %p217
    %p219 = scmp.ne.s32.totalorder %s205, %s206
    %p220 = scmp.eq.s32.totalorder %s20, 1
    %p221 = por %p219, %p220
    %p223 = scmp.ne.s32.totalorder %s206, %s222
    %p224 = scmp.eq.s32.totalorder %s20, 0
    %p225 = por %p223, %p224
    %p226 = scmp.le.s32.totalorder 1, %s14
    %p227 = scmp.lt.s32.totalorder %s14, 3
    %p228 = pnand %p226, %p227
    %p229 = pneg %p228
    // Predicated region
    $region9: #{timesfm_mlp.1} parent=5 // pred_check
      _
    $region10: #{timesfm_mlp.1} parent=5 // pred_check_branch
      %231 = sbr.rel (%p228) target = $region12
    $region11: #{timesfm_mlp.1} parent=5 // pred_region
      %s232 = ssub.s32 %s14, 1
      // Predicated region
      $region13: #{timesfm_mlp.1} parent=11 // pred_check
        %p233 = pneg %p87
      $region14: #{timesfm_mlp.1} parent=11 // pred_check_branch
        %235 = sbr.rel (%p233) target = $region16
      $region15: #{timesfm_mlp.1} parent=11 // pred_region
        _
      $region16: #{timesfm_mlp.1} parent=11 // pred_fallthru
        _
      // Predicated region
      $region17: #{timesfm_mlp.1} parent=11 // pred_check
        %p236 = pneg %p108
      $region18: #{timesfm_mlp.1} parent=11 // pred_check_branch
        %238 = sbr.rel (%p236) target = $region20
      $region19: #{timesfm_mlp.1} parent=11 // pred_region
        _
      $region20: #{timesfm_mlp.1} parent=11 // pred_fallthru
        _
      // Predicated region
      $region21: #{timesfm_mlp.1} parent=11 // pred_check
        %p239 = pneg %p129
      $region22: #{timesfm_mlp.1} parent=11 // pred_check_branch
        %241 = sbr.rel (%p239) target = $region24
      $region23: #{timesfm_mlp.1} parent=11 // pred_region
        _
      $region24: #{timesfm_mlp.1} parent=11 // pred_fallthru
        _
      // Predicated region
      $region25: #{timesfm_mlp.1} parent=11 // pred_check
        %p242 = pneg %p150
      $region26: #{timesfm_mlp.1} parent=11 // pred_check_branch
        %244 = sbr.rel (%p242) target = $region28
      $region27: #{timesfm_mlp.1} parent=11 // pred_region
        _
      $region28: #{timesfm_mlp.1} parent=11 // pred_fallthru
        _
      // Predicated region
      $region29: #{timesfm_mlp.1} parent=11 // pred_check
        %p245 = pneg %p171
      $region30: #{timesfm_mlp.1} parent=11 // pred_check_branch
        %247 = sbr.rel (%p245) target = $region32
      $region31: #{timesfm_mlp.1} parent=11 // pred_region
        _
      $region32: #{timesfm_mlp.1} parent=11 // pred_fallthru
        _
      // Predicated region
      $region33: #{timesfm_mlp.1} parent=11 // pred_check
        %p248 = pneg %p192
      $region34: #{timesfm_mlp.1} parent=11 // pred_check_branch
        %250 = sbr.rel (%p248) target = $region36
      $region35: #{timesfm_mlp.1} parent=11 // pred_region
        _
      $region36: #{timesfm_mlp.1} parent=11 // pred_fallthru
        _
    $region12: #{timesfm_mlp.1} parent=5 // pred_fallthru
      _
    %p251 = scmp.lt.s32.totalorder %s14, 2
    // Predicated region
    $region37: #{timesfm_mlp.1} parent=5 // pred_check
      %p252 = pneg %p251
    $region38: #{timesfm_mlp.1} parent=5 // pred_check_branch
      %254 = sbr.rel (%p252) target = $region40
    $region39: #{timesfm_mlp.1} parent=5 // pred_region
      // Predicated region
      $region41: #{timesfm_mlp.1} parent=39 // pred_check
        %p255 = pneg %p34
      $region42: #{timesfm_mlp.1} parent=39 // pred_check_branch
        %257 = sbr.rel (%p255) target = $region44
      $region43: #{timesfm_mlp.1} parent=39 // pred_region
        %p258 = scmp.lt.s32.totalorder %s14, 1
        %s259 = scalar_select %p258, %s14, 1
        %s260 = smul.addr %s259, 8
        %s261 = scalar_lea.vmem %s0, %s260
      $region44: #{timesfm_mlp.1} parent=39 // pred_fallthru
        _
      // Predicated region
      $region45: #{timesfm_mlp.1} parent=39 // pred_check
        %p262 = pneg %p60
      $region46: #{timesfm_mlp.1} parent=39 // pred_check_branch
        %264 = sbr.rel (%p262) target = $region48
      $region47: #{timesfm_mlp.1} parent=39 // pred_region
        %p265 = scmp.lt.s32.totalorder %s14, 1
        %s266 = scalar_select %p265, %s14, 1
        %s267 = smul.addr %s266, 8
        %s268 = scalar_lea.vmem %s1, %s267
      $region48: #{timesfm_mlp.1} parent=39 // pred_fallthru
        _
    $region40: #{timesfm_mlp.1} parent=5 // pred_fallthru
      _
    %p269 = scmp.le.s32.totalorder 1, %s14
    %p270 = scmp.lt.s32.totalorder %s14, 3
    %p271 = pnand %p269, %p270
    %p272 = pneg %p271
    // Predicated region
    $region49: #{timesfm_mlp.1} parent=5 // pred_check
      _
    $region50: #{timesfm_mlp.1} parent=5 // pred_check_branch
      %274 = sbr.rel (%p271) target = $region52
    $region51: #{timesfm_mlp.1} parent=5 // pred_region
      %s275 = ssub.s32 %s14, 1
      %p276 = scmp.lt.s32.totalorder %s19, 1
      %s277 = scalar_select %p276, %s19, 1
      %s278 = smul.addr %s277, 8
      %s279 = scalar_lea.vmem %s0, %s278
      %p280 = pneg %p40
      %p281 = pneg %p37
      %p282 = scmp.lt.s32.totalorder %s19, 1
      %s283 = scalar_select %p282, %s19, 1
      %s284 = smul.addr %s283, 8
      %s285 = scalar_lea.vmem %s1, %s284
      %p286 = pneg %p66
      %p287 = pneg %p63
      %p288 = pneg %p87
      %p289 = pneg %p84
      %p290 = pneg %p108
      %p291 = pneg %p105
      %p292 = pneg %p129
      %p293 = pneg %p126
      %p294 = pneg %p150
      %p295 = pneg %p147
      %p296 = pneg %p171
      %p297 = pneg %p168
      %p298 = pneg %p192
      %p299 = pneg %p189
      %p300 = pneg %p218
      %p301 = pneg %p215
      %p302 = scmp.lt.s32.totalorder %s19, 1
      %s303 = scalar_select %p302, %s19, 1
      %s304 = smul.addr %s303, 8
      %s305 = scalar_lea.vmem %s8, %s304
      %p306 = scmp.lt.s32.totalorder %s19, 1
      %s307 = scalar_select %p306, %s19, 1
      %s308 = smul.addr %s307, 8
      %s309 = scalar_lea.vmem %s0, %s308
      %p310 = scmp.lt.s32.totalorder %s19, 1
      %s311 = scalar_select %p310, %s19, 1
      %s312 = smul.addr %s311, 8
      %s313 = scalar_lea.vmem %s1, %s312
      %p314 = scmp.lt.s32.totalorder %s19, 1
      %s315 = scalar_select %p314, %s19, 1
      %s316 = smul.addr %s315, 8
      %s317 = scalar_lea.vmem %s8, %s316
      %v318 = vld [vmem:[%s2] sm:$0x1]
      %v319 = vld [vmem:[%s3] sm:$0x1]
      %v320 = vld [vmem:[%s5] sm:$0x1]
      %v321 = vld [vmem:[%s7] sm:$0x1]
      %v322 = vld [vmem:[%s309] sm:$0xff]
      %323 = vadd.xlane.f32.xlu0 %v322
      %v324 = vpop.xlane.xlu0 %323
      %v325 = vmul.f32 %v324, 0.03125
      %v326 = vmul.f32 %v322, %v322
      %327 = vadd.xlane.f32.xlu0 %v326
      %v328 = vpop.xlane.xlu0 %327
      %v329 = vmul.f32 %v328, 0.03125
      %v330 = vmul.f32 %v325, %v325
      %v331 = vsub.f32 %v329, %v330
      %v332 = vmax.f32 %v331, 0.0
      %v333 = vadd.f32 %v332, 1e-06
      %v334 = vrsqrt.pop %v333
      %v335 = vsub.f32 %v322, %v325
      %v337 = vlaneseq
      %v338 = vshrl.u32 %v337, 7
      %v339 = vsub.s32 0, %v338
      %v340 = vrot.slane %v318, %v339
      %v342 = vmul.f32 %v334, %v340
      %v343 = vmul.f32 %v335, %v342
      %v345 = vlaneseq
      %v346 = vshrl.u32 %v345, 7
      %v347 = vsub.s32 0, %v346
      %v348 = vrot.slane %v319, %v347
      %v350 = vadd.f32 %v343, %v348
      %v351 = vld [vmem:[%s4] sm:$0xff]
      %v352 = vld [vmem:[%s4 + $0x8] sm:$0xff]
      %v353 = vld [vmem:[%s4 + $0x10] sm:$0xff]
      %v354 = vld [vmem:[%s4 + $0x18] sm:$0xff]
      %v355 = vld [vmem:[%s4 + $0x20] sm:$0xff]
      %v356 = vld [vmem:[%s4 + $0x28] sm:$0xff]
      %v357 = vld [vmem:[%s4 + $0x30] sm:$0xff]
      %v358 = vld [vmem:[%s4 + $0x38] sm:$0xff]
      %v359 = vld [vmem:[%s4 + $0x40] sm:$0xff]
      %v360 = vld [vmem:[%s4 + $0x48] sm:$0xff]
      %v361 = vld [vmem:[%s4 + $0x50] sm:$0xff]
      %v362 = vld [vmem:[%s4 + $0x58] sm:$0xff]
      %v363 = vld [vmem:[%s4 + $0x60] sm:$0xff]
      %v364 = vld [vmem:[%s4 + $0x68] sm:$0xff]
      %v365 = vld [vmem:[%s4 + $0x70] sm:$0xff]
      %v366 = vld [vmem:[%s4 + $0x78] sm:$0xff]
      %v368 = vlaneseq
      %v369 = vshrl.u32 %v368, 7
      %v370 = vsub.s32 0, %v369
      %v371 = vrot.slane %v320, %v370
      %373 = vmatprep.subr.mxu0 0.0
      %374 = vmatpush1.msra.mxu0 %v351
      %375 = vmatprep.subr.mxu0 0.0
      %376 = vmatpush1.msra.mxu0 %v352
      %377 = vmatprep.subr.mxu0 0.0
      %378 = vmatpush1.msra.mxu0 %v353
      %379 = vmatprep.subr.mxu0 0.0
      %380 = vmatpush1.msra.mxu0 %v354
      %381 = vmatprep.subr.mxu0 0.0
      %382 = vmatpush1.msra.mxu0 %v355
      %383 = vmatprep.subr.mxu0 0.0
      %384 = vmatpush1.msra.mxu0 %v356
      %385 = vmatprep.subr.mxu0 0.0
      %386 = vmatpush1.msra.mxu0 %v357
      %387 = vmatprep.subr.mxu0 0.0
      %388 = vmatpush1.msra.mxu0 %v358
      %389 = vmatprep.subr.mxu0 0.0
      %390 = vmatpush1.msra.mxu0 %v359
      %391 = vmatprep.subr.mxu0 0.0
      %392 = vmatpush1.msra.mxu0 %v360
      %393 = vmatprep.subr.mxu0 0.0
      %394 = vmatpush1.msra.mxu0 %v361
      %395 = vmatprep.subr.mxu0 0.0
      %396 = vmatpush1.msra.mxu0 %v362
      %397 = vmatprep.subr.mxu0 0.0
      %398 = vmatpush1.msra.mxu0 %v363
      %399 = vmatprep.subr.mxu0 0.0
      %400 = vmatpush1.msra.mxu0 %v364
      %401 = vmatprep.subr.mxu0 0.0
      %402 = vmatpush1.msra.mxu0 %v365
      %403 = vmatprep.subr.mxu0 0.0
      %404 = vmatpush1.msra.mxu0 %v366
      %405 = vmatprep.subr.mxu0 0.0
      %406 = vmatpush1.msra.mxu0 0.0
      %407 = vmatprep.subr.mxu0 0.0
      %408 = vmatpush1.msra.mxu0 0.0
      %409 = vmatprep.subr.mxu0 0.0
      %410 = vmatpush1.msra.mxu0 0.0
      %411 = vmatprep.subr.mxu0 0.0
      %412 = vmatpush1.msra.mxu0 0.0
      %413 = vmatprep.subr.mxu0 0.0
      %414 = vmatpush1.msra.mxu0 0.0
      %415 = vmatprep.subr.mxu0 0.0
      %416 = vmatpush1.msra.mxu0 0.0
      %417 = vmatprep.subr.mxu0 0.0
      %418 = vmatpush1.msra.mxu0 0.0
      %419 = vmatprep.subr.mxu0 0.0
      %420 = vmatpush1.msra.mxu0 0.0
      %421 = vmatprep.subr.mxu0 0.0
      %422 = vmatpush1.msra.mxu0 0.0
      %423 = vmatprep.subr.mxu0 0.0
      %424 = vmatpush1.msra.mxu0 0.0
      %425 = vmatprep.subr.mxu0 0.0
      %426 = vmatpush1.msra.mxu0 0.0
      %427 = vmatprep.subr.mxu0 0.0
      %428 = vmatpush1.msra.mxu0 0.0
      %429 = vmatprep.subr.mxu0 0.0
      %430 = vmatpush1.msra.mxu0 0.0
      %431 = vmatprep.subr.mxu0 0.0
      %432 = vmatpush1.msra.mxu0 0.0
      %433 = vmatprep.subr.mxu0 0.0
      %434 = vmatpush1.msra.mxu0 0.0
      %435 = vmatprep.subr.mxu0 0.0
      %436 = vmatpush1.msra.mxu0 0.0
      %437 = vmatprep.mubr.f32.mxu0 0.0
      %438 = vmatmul.mubr.f32.gmra.mrb[0].mxu0 %v350
      %v439 = vpop.f32.mrb[0].mxu0
      %v440 = vadd.f32 %v371, %v439
      %v441 = vpop.f32.mrb[0].mxu0
      %442 = vdwg.mxu0
      %v443 = vmax.f32 %v440, 0.0
      %v444 = vld [vmem:[%s6] sm:$0xff]
      %v445 = vld [vmem:[%s6 + $0x8] sm:$0xff]
      %v446 = vld [vmem:[%s6 + $0x10] sm:$0xff]
      %v447 = vld [vmem:[%s6 + $0x18] sm:$0xff]
      %v448 = vld [vmem:[%s6 + $0x20] sm:$0xff]
      %v449 = vld [vmem:[%s6 + $0x28] sm:$0xff]
      %v450 = vld [vmem:[%s6 + $0x30] sm:$0xff]
      %v451 = vld [vmem:[%s6 + $0x38] sm:$0xff]
      %v452 = vld [vmem:[%s6 + $0x40] sm:$0xff]
      %v453 = vld [vmem:[%s6 + $0x48] sm:$0xff]
      %v454 = vld [vmem:[%s6 + $0x50] sm:$0xff]
      %v455 = vld [vmem:[%s6 + $0x58] sm:$0xff]
      %v456 = vld [vmem:[%s6 + $0x60] sm:$0xff]
      %v457 = vld [vmem:[%s6 + $0x68] sm:$0xff]
      %v458 = vld [vmem:[%s6 + $0x70] sm:$0xff]
      %v459 = vld [vmem:[%s6 + $0x78] sm:$0xff]
      %v460 = vld [vmem:[%s313] sm:$0xff]
      %v461 = vsub.f32 1.0, %v460
      %v463 = vlaneseq
      %v464 = vshrl.u32 %v463, 7
      %v465 = vsub.s32 0, %v464
      %v466 = vrot.slane %v321, %v465
      %468 = vmatprep.subr.mxu0 0.0
      %469 = vmatpush1.msra.mxu0 %v444
      %470 = vmatprep.subr.mxu0 0.0
      %471 = vmatpush1.msra.mxu0 %v445
      %472 = vmatprep.subr.mxu0 0.0
      %473 = vmatpush1.msra.mxu0 %v446
      %474 = vmatprep.subr.mxu0 0.0
      %475 = vmatpush1.msra.mxu0 %v447
      %476 = vmatprep.subr.mxu0 0.0
      %477 = vmatpush1.msra.mxu0 %v448
      %478 = vmatprep.subr.mxu0 0.0
      %479 = vmatpush1.msra.mxu0 %v449
      %480 = vmatprep.subr.mxu0 0.0
      %481 = vmatpush1.msra.mxu0 %v450
      %482 = vmatprep.subr.mxu0 0.0
      %483 = vmatpush1.msra.mxu0 %v451
      %484 = vmatprep.subr.mxu0 0.0
      %485 = vmatpush1.msra.mxu0 %v452
      %486 = vmatprep.subr.mxu0 0.0
      %487 = vmatpush1.msra.mxu0 %v453
      %488 = vmatprep.subr.mxu0 0.0
      %489 = vmatpush1.msra.mxu0 %v454
      %490 = vmatprep.subr.mxu0 0.0
      %491 = vmatpush1.msra.mxu0 %v455
      %492 = vmatprep.subr.mxu0 0.0
      %493 = vmatpush1.msra.mxu0 %v456
      %494 = vmatprep.subr.mxu0 0.0
      %495 = vmatpush1.msra.mxu0 %v457
      %496 = vmatprep.subr.mxu0 0.0
      %497 = vmatpush1.msra.mxu0 %v458
      %498 = vmatprep.subr.mxu0 0.0
      %499 = vmatpush1.msra.mxu0 %v459
      %500 = vmatprep.subr.mxu0 0.0
      %501 = vmatpush1.msra.mxu0 0.0
      %502 = vmatprep.subr.mxu0 0.0
      %503 = vmatpush1.msra.mxu0 0.0
      %504 = vmatprep.subr.mxu0 0.0
      %505 = vmatpush1.msra.mxu0 0.0
      %506 = vmatprep.subr.mxu0 0.0
      %507 = vmatpush1.msra.mxu0 0.0
      %508 = vmatprep.subr.mxu0 0.0
      %509 = vmatpush1.msra.mxu0 0.0
      %510 = vmatprep.subr.mxu0 0.0
      %511 = vmatpush1.msra.mxu0 0.0
      %512 = vmatprep.subr.mxu0 0.0
      %513 = vmatpush1.msra.mxu0 0.0
      %514 = vmatprep.subr.mxu0 0.0
      %515 = vmatpush1.msra.mxu0 0.0
      %516 = vmatprep.subr.mxu0 0.0
      %517 = vmatpush1.msra.mxu0 0.0
      %518 = vmatprep.subr.mxu0 0.0
      %519 = vmatpush1.msra.mxu0 0.0
      %520 = vmatprep.subr.mxu0 0.0
      %521 = vmatpush1.msra.mxu0 0.0
      %522 = vmatprep.subr.mxu0 0.0
      %523 = vmatpush1.msra.mxu0 0.0
      %524 = vmatprep.subr.mxu0 0.0
      %525 = vmatpush1.msra.mxu0 0.0
      %526 = vmatprep.subr.mxu0 0.0
      %527 = vmatpush1.msra.mxu0 0.0
      %528 = vmatprep.subr.mxu0 0.0
      %529 = vmatpush1.msra.mxu0 0.0
      %530 = vmatprep.subr.mxu0 0.0
      %531 = vmatpush1.msra.mxu0 0.0
      %532 = vmatprep.mubr.f32.mxu0 0.0
      %533 = vmatmul.mubr.f32.gmra.mrb[0].mxu0 %v443
      %v534 = vpop.f32.mrb[0].mxu0
      %v535 = vadd.f32 %v466, %v534
      %v536 = vpop.f32.mrb[0].mxu0
      %537 = vdwg.mxu0
      %539 = vset.pattern.permute.xlu0 0
      %540 = vperm.xlu0 %539, %v461
      %v541 = vpop.permute.xlu0 %540
      %v543 = vmul.f32 %v535, %v541
      %v544 = vadd.f32 %v543, %v322
      %545 = vst [vmem:[%s317] sm:$0xff] %v544
      %p546 = scmp.lt.s32.totalorder %s19, 1
      %s547 = scalar_select %p546, %s19, 1
      %s548 = smul.addr %s547, 8
      %s549 = scalar_lea.vmem %s8, %s548
      // Predicated region
      $region53: #{timesfm_mlp.1} parent=51 // pred_check
        %p550 = pneg %p215
      $region54: #{timesfm_mlp.1} parent=51 // pred_check_branch
        %552 = sbr.rel (%p550) target = $region56
      $region55: #{timesfm_mlp.1} parent=51 // pred_region
        _
      $region56: #{timesfm_mlp.1} parent=51 // pred_fallthru
        _
    $region52: #{timesfm_mlp.1} parent=5 // pred_fallthru
      _
    %p553 = scmp.le.s32.totalorder 2, %s14
    // Predicated region
    $region57: #{timesfm_mlp.1} parent=5 // pred_check
      %p554 = pneg %p553
    $region58: #{timesfm_mlp.1} parent=5 // pred_check_branch
      %556 = sbr.rel (%p554) target = $region60
    $region59: #{timesfm_mlp.1} parent=5 // pred_region
      %s557 = ssub.s32 %s14, 2
      // Predicated region
      $region61: #{timesfm_mlp.1} parent=59 // pred_check
        %p558 = pneg %p221
      $region62: #{timesfm_mlp.1} parent=59 // pred_check_branch
        %560 = sbr.rel (%p558) target = $region64
      $region63: #{timesfm_mlp.1} parent=59 // pred_region
        %p561 = scmp.lt.s32.totalorder %s20, 1
        %s562 = scalar_select %p561, %s20, 1
        %s563 = smul.addr %s562, 8
        %s564 = scalar_lea.vmem %s8, %s563
      $region64: #{timesfm_mlp.1} parent=59 // pred_fallthru
        _
    $region60: #{timesfm_mlp.1} parent=5 // pred_fallthru
      _
  $region6: #{timesfm_mlp.1} parent=0 // loop_footer
    %s18 = sadd.s32 1, %s14
  $region7: #{timesfm_mlp.1} parent=0 // loop_footer_branch
    %13 = sbr.rel target = $region3
  $region8: #{timesfm_mlp.1} parent=0 // loop_exit
    _

</llo_original>
